<compile_context>
chip_gen: v5e
topology: v5e:2x2
jax: 0.10.0
libtpu: 0.0.40
codegen_flags: <defaults>
</compile_context>

<pallas_src>
import jax
import jax.numpy as jnp
from jax import lax
from jax.experimental import pallas as pl
from jax.experimental.pallas import tpu as pltpu


D_IN, D_H1, D_H2, D_OUT = 23, 12, 4, 1


def mlp_kernel(x_ref, w1t_ref, w2t_ref, b1_ref, b2_ref, w3_ref, b3_ref, o_ref):
    x = x_ref[...]                                    # (tile_b, 23) f32

    # Layer 1 on the MXU via contract-last-dims (A @ B^T): x stays in its
    # natural row-major layout.  (12, 23) . (tile_b, 23)^T -> (12, tile_b)
    z1 = lax.dot_general(w1t_ref[...], x,
                         (((1,), (1,)), ((), ())),
                         preferred_element_type=jnp.float32)
    h1t = jax.nn.sigmoid(z1 + b1_ref[...])            # (12, tile_b); b1 (12,1)

    # Layer 2: standard MXU matmul, (4, 12) @ (12, tile_b) -> (4, tile_b)
    z2 = lax.dot_general(w2t_ref[...], h1t,
                         (((1,), (0,)), ((), ())),
                         preferred_element_type=jnp.float32)
    h2t = jax.nn.sigmoid(z2 + b2_ref[...])             # (4, tile_b); b2 (4,1)

    # Layer 3 (K=4, N=1 per row) on the VPU/XLU: weighted sublane reduce.
    # Result (1, tile_b) is lane-dense -> unmasked, contiguous output store.
    z3 = jnp.sum(h2t * w3_ref[...], axis=0, keepdims=True) + b3_ref[...]
    o_ref[...] = jax.nn.sigmoid(z3).astype(o_ref.dtype)


def mlp_forward(x, kparams, *, block_b=8192, min_pallas_batch=512,
                force_pallas=False):
    """x: (B, 23) f32.  kparams from prepare_params().  Returns (B, 1) f32."""
    w1t, w2t, b1c, b2c, w3c, b3c = kparams
    B = x.shape[0]

    # Tiny batches: a standalone Pallas launch is pure overhead -> let XLA fuse.
    if B < min_pallas_batch and not force_pallas:
        h1 = jax.nn.sigmoid(x @ w1t.T + b1c[:, 0])
        h2 = jax.nn.sigmoid(h1 @ w2t.T + b2c[:, 0])
        return jax.nn.sigmoid(h2 @ w3c + b3c[0, 0])

    if B <= block_b:
        tile_b = B                                   # single full-extent block
    else:
        assert block_b % 128 == 0, \
            "block_b must be a multiple of 128 for the lane-dense output spec"
        tile_b = block_b

    n_blocks = pl.cdiv(B, tile_b)                    # no jnp.pad of x
    out_cols = n_blocks * tile_b                     # every out block in-bounds

    # Scoped-VMEM budget: double-buffered x tile (lanes padded 23->128),
    # (1, tile_b) output tile (sublanes padded 1->8), tiny resident params.
    x_buf_bytes = 2 * tile_b * 128 * 4
    o_buf_bytes = 2 * 8 * tile_b * 4
    p_buf_bytes = 7 * 2 * 8 * 128 * 4
    need = x_buf_bytes + o_buf_bytes + p_buf_bytes
    vmem_limit = min(max(int(1.25 * need) + (2 << 20), 32 << 20), 62 << 20)

    out = pl.pallas_call(
        mlp_kernel,
        out_shape=jax.ShapeDtypeStruct((1, out_cols), jnp.float32),
        grid=(n_blocks,),
        in_specs=[
            pl.BlockSpec((tile_b, D_IN), lambda i: (i, 0)),     # x tile
            # Constant index maps -> fetched once, VMEM-resident across steps.
            pl.BlockSpec((D_H1, D_IN), lambda i: (0, 0)),       # W1^T (12,23)
            pl.BlockSpec((D_H2, D_H1), lambda i: (0, 0)),       # W2^T (4,12)
            pl.BlockSpec((D_H1, 1), lambda i: (0, 0)),          # b1   (12,1)
            pl.BlockSpec((D_H2, 1), lambda i: (0, 0)),          # b2   (4,1)
            pl.BlockSpec((D_H2, 1), lambda i: (0, 0)),          # w3   (4,1)
            pl.BlockSpec((1, 1), lambda i: (0, 0)),             # b3   (1,1)
        ],
        out_specs=pl.BlockSpec((1, tile_b), lambda i: (0, i)),
        compiler_params=pltpu.CompilerParams(
            dimension_semantics=("parallel",),
            vmem_limit_bytes=vmem_limit),
    )(x, w1t, w2t, b1c, b2c, w3c, b3c)

    # (1, n_blocks*tile_b) -> (B, 1): free row-major reshape + tail slice.
    return out[0, :B].reshape(B, 1)


def prepare_params(w1, b1, w2, b2, w3, b3):
    """PyTorch-orientation params (in->out) -> kernel-orientation arrays."""
    return (jnp.asarray(w1, jnp.float32).T,                 # (12, 23)
            jnp.asarray(w2, jnp.float32).T,                 # (4, 12)
            jnp.asarray(b1, jnp.float32).reshape(D_H1, 1),  # (12, 1)
            jnp.asarray(b2, jnp.float32).reshape(D_H2, 1),  # (4, 1)
            jnp.asarray(w3, jnp.float32).reshape(D_H2, 1),  # (4, 1)
            jnp.asarray(b3, jnp.float32).reshape(1, 1))     # (1, 1)


def init_params(key):
    k1, k2, k3, k4, k5, k6 = jax.random.split(key, 6)

    def linear(kw, kb, fan_in, fan_out):
        bound = 1.0 / jnp.sqrt(fan_in)
        w = jax.random.uniform(kw, (fan_in, fan_out), jnp.float32, -bound, bound)
        b = jax.random.uniform(kb, (fan_out,), jnp.float32, -bound, bound)
        return w, b

    w1, b1 = linear(k1, k2, D_IN, D_H1)
    w2, b2 = linear(k3, k4, D_H1, D_H2)
    w3, b3 = linear(k5, k6, D_H2, D_OUT)
    return w1, b1, w2, b2, w3, b3


def mlp_ref(x, w1, b1, w2, b2, w3, b3):
    h = jax.nn.sigmoid(x @ w1 + b1)
    h = jax.nn.sigmoid(h @ w2 + b2)
    return jax.nn.sigmoid(h @ w3 + b3)


if __name__ == "__main__":
    key = jax.random.PRNGKey(0)
    k_x, k_p, k_x2 = jax.random.split(key, 3)

    w1, b1, w2, b2, w3, b3 = init_params(k_p)
    kparams = prepare_params(w1, b1, w2, b2, w3, b3)

    # --- small batch, single-block Pallas path (strict f32 check) ---
    B = 8
    x = jax.random.normal(k_x, (B, D_IN), dtype=jnp.float32)
    out = jax.block_until_ready(mlp_forward(x, kparams, force_pallas=True))
    ref = mlp_ref(x, w1, b1, w2, b2, w3, b3)
    assert out.shape == (B, 1)
    assert jnp.allclose(out, ref, atol=1e-5), "small-batch mismatch vs reference"

    # --- non-divisible batch: multi-block grid + partial boundary block ---
    B2 = 1000
    x2 = jax.random.normal(k_x2, (B2, D_IN), dtype=jnp.float32)
    out2 = jax.block_until_ready(
        mlp_forward(x2, kparams, block_b=256, force_pallas=True))
    ref2 = mlp_ref(x2, w1, b1, w2, b2, w3, b3)
    assert out2.shape == (B2, 1)
    assert jnp.allclose(out2, ref2, atol=1e-5), "multi-block mismatch vs reference"

    # --- tiny-batch XLA-fused fallback path (no Pallas launch) ---
    out3 = jax.block_until_ready(mlp_forward(x, kparams))
    assert jnp.allclose(out3, ref, atol=1e-5), "fallback mismatch vs reference"

    print("KERNEL_OK")
</pallas_src>

<mosaic_0001>
module attributes {stable_mosaic.version = 11 : i64} {
  func.func @mlp_kernel(%arg0: i32, %arg1: memref<8x23xf32, #tpu.memory_space<vmem>>, %arg2: memref<12x23xf32, #tpu.memory_space<vmem>>, %arg3: memref<4x12xf32, #tpu.memory_space<vmem>>, %arg4: memref<12x1xf32, #tpu.memory_space<vmem>>, %arg5: memref<4x1xf32, #tpu.memory_space<vmem>>, %arg6: memref<4x1xf32, #tpu.memory_space<vmem>>, %arg7: memref<1x1xf32, #tpu.memory_space<vmem>>, %arg8: memref<1x8xf32, #tpu.memory_space<vmem>>) attributes {dimension_semantics = [#tpu.dimension_semantics<parallel>], iteration_bounds = array<i64: 1>, scalar_prefetch = 0 : i64, scratch_operands = 0 : i64, tpu.core_type = #tpu.core_type<tc>, window_params = [{transform_indices = @transform_0, window_bounds = array<i64: 8, 23>}, {pipeline_mode = #tpu.pipeline_mode<synchronous>, transform_indices = @transform_1, window_bounds = array<i64: 12, 23>}, {pipeline_mode = #tpu.pipeline_mode<synchronous>, transform_indices = @transform_2, window_bounds = array<i64: 4, 12>}, {pipeline_mode = #tpu.pipeline_mode<synchronous>, transform_indices = @transform_3, window_bounds = array<i64: 12, 1>}, {pipeline_mode = #tpu.pipeline_mode<synchronous>, transform_indices = @transform_4, window_bounds = array<i64: 4, 1>}, {pipeline_mode = #tpu.pipeline_mode<synchronous>, transform_indices = @transform_5, window_bounds = array<i64: 4, 1>}, {pipeline_mode = #tpu.pipeline_mode<synchronous>, transform_indices = @transform_6, window_bounds = array<i64: 1, 1>}, {transform_indices = @transform_7, window_bounds = array<i64: 1, 8>}]} {
    %c0 = arith.constant 0 : index
    %c0_0 = arith.constant 0 : index
    %0 = vector.load %arg1[%c0, %c0_0] : memref<8x23xf32, #tpu.memory_space<vmem>>, vector<8x23xf32>
    %c0_1 = arith.constant 0 : index
    %c0_2 = arith.constant 0 : index
    %1 = vector.load %arg2[%c0_1, %c0_2] : memref<12x23xf32, #tpu.memory_space<vmem>>, vector<12x23xf32>
    %cst = arith.constant dense<0.000000e+00> : vector<12x8xf32>
    %2 = tpu.matmul %1, %0, %cst {dimension_numbers = #tpu.dot_dimension_numbers<[1], [1], [0], [0], [0, 0, 1, 0], [], []>} : vector<12x23xf32>, vector<8x23xf32>, vector<12x8xf32> -> vector<12x8xf32>
    %c0_3 = arith.constant 0 : index
    %c0_4 = arith.constant 0 : index
    %3 = vector.load %arg4[%c0_3, %c0_4] : memref<12x1xf32, #tpu.memory_space<vmem>>, vector<12x1xf32>
    %4 = vector.broadcast %3 : vector<12x1xf32> to vector<12x8xf32>
    %5 = arith.addf %2, %4 : vector<12x8xf32>
    %6 = arith.negf %5 : vector<12x8xf32>
    %7 = math.exp %6 : vector<12x8xf32>
    %cst_5 = arith.constant 1.000000e+00 : f32
    %8 = vector.broadcast %cst_5 : f32 to vector<12x8xf32>
    %9 = arith.addf %8, %7 : vector<12x8xf32>
    %10 = arith.divf %8, %9 : vector<12x8xf32>
    %c0_6 = arith.constant 0 : index
    %c0_7 = arith.constant 0 : index
    %11 = vector.load %arg3[%c0_6, %c0_7] : memref<4x12xf32, #tpu.memory_space<vmem>>, vector<4x12xf32>
    %cst_8 = arith.constant dense<0.000000e+00> : vector<4x8xf32>
    %12 = tpu.matmul %11, %10, %cst_8 {dimension_numbers = #tpu.dot_dimension_numbers<[1], [0], [0], [1], [0, 0, 1, 1], [], []>} : vector<4x12xf32>, vector<12x8xf32>, vector<4x8xf32> -> vector<4x8xf32>
    %c0_9 = arith.constant 0 : index
    %c0_10 = arith.constant 0 : index
    %13 = vector.load %arg5[%c0_9, %c0_10] : memref<4x1xf32, #tpu.memory_space<vmem>>, vector<4x1xf32>
    %14 = vector.broadcast %13 : vector<4x1xf32> to vector<4x8xf32>
    %15 = arith.addf %12, %14 : vector<4x8xf32>
    %16 = arith.negf %15 : vector<4x8xf32>
    %17 = math.exp %16 : vector<4x8xf32>
    %cst_11 = arith.constant 1.000000e+00 : f32
    %18 = vector.broadcast %cst_11 : f32 to vector<4x8xf32>
    %19 = arith.addf %18, %17 : vector<4x8xf32>
    %20 = arith.divf %18, %19 : vector<4x8xf32>
    %c0_12 = arith.constant 0 : index
    %c0_13 = arith.constant 0 : index
    %21 = vector.load %arg6[%c0_12, %c0_13] : memref<4x1xf32, #tpu.memory_space<vmem>>, vector<4x1xf32>
    %22 = vector.broadcast %21 : vector<4x1xf32> to vector<4x8xf32>
    %23 = arith.mulf %20, %22 : vector<4x8xf32>
    %cst_14 = arith.constant dense<0.000000e+00> : vector<8xf32>
    %24 = vector.multi_reduction <add>, %23, %cst_14 [0] : vector<4x8xf32> to vector<8xf32>
    %25 = vector.shape_cast %24 : vector<8xf32> to vector<1x8xf32>
    %c0_15 = arith.constant 0 : index
    %c0_16 = arith.constant 0 : index
    %26 = vector.load %arg7[%c0_15, %c0_16] : memref<1x1xf32, #tpu.memory_space<vmem>>, vector<1x1xf32>
    %27 = vector.broadcast %26 : vector<1x1xf32> to vector<1x8xf32>
    %28 = arith.addf %25, %27 : vector<1x8xf32>
    %29 = arith.negf %28 : vector<1x8xf32>
    %30 = math.exp %29 : vector<1x8xf32>
    %cst_17 = arith.constant 1.000000e+00 : f32
    %31 = vector.broadcast %cst_17 : f32 to vector<1x8xf32>
    %32 = arith.addf %31, %30 : vector<1x8xf32>
    %33 = arith.divf %31, %32 : vector<1x8xf32>
    %c0_18 = arith.constant 0 : index
    %c0_19 = arith.constant 0 : index
    %34 = vector.load %arg8[%c0_18, %c0_19] : memref<1x8xf32, #tpu.memory_space<vmem>>, vector<1x8xf32>
    tpu.vector_store %arg8[%c0_18, %c0_19], %33 {strides = array<i32>} : memref<1x8xf32, #tpu.memory_space<vmem>>, vector<1x8xf32>,
    return
  }
  func.func @transform_0(%arg0: i32) -> (i32, i32) {
    %c0_i32 = arith.constant 0 : i32
    %c0_i32_0 = arith.constant 0 : i32
    return %arg0, %c0_i32 : i32, i32
  }
  func.func @transform_1(%arg0: i32) -> (i32, i32) {
    %c0_i32 = arith.constant 0 : i32
    %c0_i32_0 = arith.constant 0 : i32
    %c0_i32_1 = arith.constant 0 : i32
    return %c0_i32, %c0_i32_0 : i32, i32
  }
  func.func @transform_2(%arg0: i32) -> (i32, i32) {
    %c0_i32 = arith.constant 0 : i32
    %c0_i32_0 = arith.constant 0 : i32
    %c0_i32_1 = arith.constant 0 : i32
    return %c0_i32, %c0_i32_0 : i32, i32
  }
  func.func @transform_3(%arg0: i32) -> (i32, i32) {
    %c0_i32 = arith.constant 0 : i32
    %c0_i32_0 = arith.constant 0 : i32
    %c0_i32_1 = arith.constant 0 : i32
    return %c0_i32, %c0_i32_0 : i32, i32
  }
  func.func @transform_4(%arg0: i32) -> (i32, i32) {
    %c0_i32 = arith.constant 0 : i32
    %c0_i32_0 = arith.constant 0 : i32
    %c0_i32_1 = arith.constant 0 : i32
    return %c0_i32, %c0_i32_0 : i32, i32
  }
  func.func @transform_5(%arg0: i32) -> (i32, i32) {
    %c0_i32 = arith.constant 0 : i32
    %c0_i32_0 = arith.constant 0 : i32
    %c0_i32_1 = arith.constant 0 : i32
    return %c0_i32, %c0_i32_0 : i32, i32
  }
  func.func @transform_6(%arg0: i32) -> (i32, i32) {
    %c0_i32 = arith.constant 0 : i32
    %c0_i32_0 = arith.constant 0 : i32
    %c0_i32_1 = arith.constant 0 : i32
    return %c0_i32, %c0_i32_0 : i32, i32
  }
  func.func @transform_7(%arg0: i32) -> (i32, i32) {
    %c0_i32 = arith.constant 0 : i32
    %c0_i32_0 = arith.constant 0 : i32
    return %c0_i32, %arg0 : i32, i32
  }
}

</mosaic_0001>

<llo_original>
// kernel: tpu_custom_call.1
$region0: #{tpu_custom_call.1}
  #allocation0 [shape = 'u32[]', space=smem, size = 0x4, offset = 0x4, fixed_abs, tag = 'smem constant byte address 0x4 - core index']
  #allocation1 [shape = 'u32[72,128]{1,0:T(1,128)}', space=vmem, size = 0x9000, scoped, tag = 'internal scratch']
  #allocation2 [shape = 'f32[1,1]{1,0:T(1,128)S(1)}', space=vmem, size = 0x200, scoped, tag = 'scoped memory for tpu_custom_call.1']
  %s0 = inlined_call_operand.hbm [shape: f32[8,23], index: 0, kind: input, shape index: {}]
  %s1 = inlined_call_operand.vmem [shape: f32[12,23], index: 1, kind: input, shape index: {}]
  %s2 = inlined_call_operand.vmem [shape: f32[4,12], index: 2, kind: input, shape index: {}]
  %s3 = inlined_call_operand.vmem [shape: f32[12,1], index: 3, kind: input, shape index: {}]
  %s4 = inlined_call_operand.vmem [shape: f32[4,1], index: 4, kind: input, shape index: {}]
  %s5 = inlined_call_operand.vmem [shape: f32[4,1], index: 5, kind: input, shape index: {}]
  %s6 = inlined_call_operand.<no memory space> [shape: f32[1,1], index: 6, kind: input, shape index: {}]
  %s7 = inlined_call_operand.hbm [shape: f32[1,8], index: 7, kind: output, shape index: {}]
  %s8 = sld [smem:[#allocation0]]
  $region42: #{tpu_custom_call.1} parent=0
    _
  %s10 = ssub.s32 1, %s8
  %s11 = scalar_select 0, %s10, %s8
  %v12 = vstv %s6
  %13 = vst [vmem:[#allocation2] sm:$0x1] %v12
  $region1: #{tpu_custom_call.1} parent=0
    #allocation3 [shape = 'u8[4096]{0}', space=vmem, size = 0x1000, scoped, tag = 'input window, operand 0, single buffered']
    #allocation4 [shape = 's32[1]{0}', space=sflag, size = 0x4, scoped, tag = 'scoped memory for tpu_custom_call.1']
    #allocation5 [shape = 's32[1]{0}', space=sflag, size = 0x4, scoped, tag = 'scoped memory for tpu_custom_call.1']
    #allocation6 [shape = 'u8[512]{0}', space=vmem, size = 0x400, scoped, tag = 'output window, operand 0, single buffered']
    %14 = vsyncpa [#allocation4], 0
    %15 = vsyncpa [#allocation5], 0
    // Predicated region
    $region2: #{tpu_custom_call.1} parent=1 // pred_check
      _
    $region3: #{tpu_custom_call.1} parent=1 // pred_check_branch
      %17 = sbr.rel (0) target = $region5
    $region4: #{tpu_custom_call.1} parent=1 // pred_region
      %19 = vsyncadd [#allocation4], 0
      %s21 = sshll.u32 %s0, 4
      %s22 = int_to_ptr.hbm [resolvable:$true] %s21
      %s23 = sshll.u32 [#allocation3], 4
      %s24 = int_to_ptr.vmem [resolvable:$true] %s23
      %26 = dma.hbm_to_vmem [thread:$0]  %s22, 128, %s24, [#allocation4]
    $region5: #{tpu_custom_call.1} parent=1 // pred_fallthru
      _
    // Predicated region
    $region6: #{tpu_custom_call.1} parent=1 // pred_check
      _
    $region7: #{tpu_custom_call.1} parent=1 // pred_check_branch
      %28 = sbr.rel (0) target = $region9
    $region8: #{tpu_custom_call.1} parent=1 // pred_region
      _
    $region9: #{tpu_custom_call.1} parent=1 // pred_fallthru
      _
    // Predicated region
    $region10: #{tpu_custom_call.1} parent=1 // pred_check
      _
    $region11: #{tpu_custom_call.1} parent=1 // pred_check_branch
      %30 = sbr.rel (0) target = $region13
    $region12: #{tpu_custom_call.1} parent=1 // pred_region
      _
    $region13: #{tpu_custom_call.1} parent=1 // pred_fallthru
      _
    // Predicated region
    $region14: #{tpu_custom_call.1} parent=1 // pred_check
      _
    $region15: #{tpu_custom_call.1} parent=1 // pred_check_branch
      %32 = sbr.rel (0) target = $region17
    $region16: #{tpu_custom_call.1} parent=1 // pred_region
      _
    $region17: #{tpu_custom_call.1} parent=1 // pred_fallthru
      _
    // Predicated region
    $region18: #{tpu_custom_call.1} parent=1 // pred_check
      _
    $region19: #{tpu_custom_call.1} parent=1 // pred_check_branch
      %34 = sbr.rel (0) target = $region21
    $region20: #{tpu_custom_call.1} parent=1 // pred_region
      _
    $region21: #{tpu_custom_call.1} parent=1 // pred_fallthru
      _
    // Predicated region
    $region22: #{tpu_custom_call.1} parent=1 // pred_check
      _
    $region23: #{tpu_custom_call.1} parent=1 // pred_check_branch
      %36 = sbr.rel (0) target = $region25
    $region24: #{tpu_custom_call.1} parent=1 // pred_region
      _
    $region25: #{tpu_custom_call.1} parent=1 // pred_fallthru
      _
    // Predicated region
    $region26: #{tpu_custom_call.1} parent=1 // pred_check
      _
    $region27: #{tpu_custom_call.1} parent=1 // pred_check_branch
      %38 = sbr.rel (0) target = $region29
    $region28: #{tpu_custom_call.1} parent=1 // pred_region
      _
    $region29: #{tpu_custom_call.1} parent=1 // pred_fallthru
      _
    // Predicated region
    $region30: #{tpu_custom_call.1} parent=1 // pred_check
      _
    $region31: #{tpu_custom_call.1} parent=1 // pred_check_branch
      %40 = sbr.rel (0) target = $region33
    $region32: #{tpu_custom_call.1} parent=1 // pred_region
      %42 = dma.done [#allocation4], 128
    $region33: #{tpu_custom_call.1} parent=1 // pred_fallthru
      _
    %v43 = vld [vmem:[#allocation3] sm:$0xff]
    %v44 = vld [vmem:[%s1] sm:$0xff]
    %v45 = vld [vmem:[%s1 + $0x8] sm:$0xf]
    %v46 = vld [vmem:[%s3] sm:$0xff]
    %v47 = vld [vmem:[%s3 + $0x8] sm:$0xf]
    %49 = vset.pattern.permute.xlu0 0
    %50 = vperm.xlu0 %49, %v46
    %v51 = vpop.permute.xlu0 %50
    %54 = vset.pattern.permute.xlu0 0
    %55 = vperm.xlu0 %54, %v47
    %v56 = vpop.permute.xlu0 %55
    %vm58 = vcmask 187392
    %v60 = vsel %vm58, %v44, 0
    %v63 = vsel %vm58, %v45, 0
    %v66 = vsel %vm58, %v43, 0
    %68 = vmatpush.xpose.msra.mxu0 0.0
    %69 = vmatpush.xpose.msra.mxu0 0.0
    %70 = vmatpush.xpose.msra.mxu0 0.0
    %71 = vmatpush.xpose.msra.mxu0 0.0
    %72 = vmatpush.xpose.msra.mxu0 0.0
    %73 = vmatpush.xpose.msra.mxu0 0.0
    %74 = vmatpush.xpose.msra.mxu0 0.0
    %75 = vmatpush.xpose.msra.mxu0 0.0
    %76 = vmatpush.xpose.msra.mxu0 0.0
    %77 = vmatpush.xpose.msra.mxu0 0.0
    %78 = vmatpush.xpose.msra.mxu0 0.0
    %79 = vmatpush.xpose.msra.mxu0 0.0
    %80 = vmatpush.xpose.msra.mxu0 0.0
    %81 = vmatpush.xpose.msra.mxu0 0.0
    %82 = vmatpush.xpose.msra.mxu0 0.0
    %83 = vmatpush.xpose.msra.mxu0 %v66
    %84 = vmatmul.f32.gmra.mxu0 %v60
    %v85 = vpop.f32.mrf.mxu0
    %v86 = vadd.f32 %v51, %v85
    %87 = vmatmul.f32.gmra.mxu0 %v63
    %v88 = vpop.f32.mrf.mxu0
    %v89 = vadd.f32 %v56, %v88
    %90 = vdwg.mxu0
    %v91 = vxor.u32 %v86, 2147483648
    %v92 = vxor.u32 %v89, 2147483648
    %v93 = vmul.f32 %v91, 1.442695
    %v94 = vpow.pop %v93
    %v95 = vmul.f32 %v92, 1.442695
    %v96 = vpow.pop %v95
    %v97 = vadd.f32 %v94, 1.0
    %v98 = vadd.f32 %v96, 1.0
    %v99 = vrcp.pop %v97
    %v100 = vmul.f32 %v97, %v99
    %v101 = vsub.f32 1.0, %v100
    %v102 = vmul.f32 %v99, %v101
    %v103 = vadd.f32 %v99, %v102
    %vm104 = vweird.f32 %v97
    %vm105 = vweird.f32 %v99
    %vm106 = vmor %vm104, %vm105
    %v107 = vsel %vm106, %v99, %v103
    %v108 = vand.u32 2147483647, %v97
    %vm109 = vcmp.eq.f32.partialorder %v108, 8.507059e+37
    %v110 = vand.u32 %v97, 2147483648
    %v111 = vor.u32 1.1754944e-38, %v110
    %v112 = vsel %vm109, %v111, %v107
    %v113 = vmul.f32 1.0, %v112
    %v114 = vrcp.pop %v98
    %v115 = vmul.f32 %v98, %v114
    %v116 = vsub.f32 1.0, %v115
    %v117 = vmul.f32 %v114, %v116
    %v118 = vadd.f32 %v114, %v117
    %vm119 = vweird.f32 %v98
    %vm120 = vweird.f32 %v114
    %vm121 = vmor %vm119, %vm120
    %v122 = vsel %vm121, %v114, %v118
    %v123 = vand.u32 2147483647, %v98
    %vm124 = vcmp.eq.f32.partialorder %v123, 8.507059e+37
    %v125 = vand.u32 %v98, 2147483648
    %v126 = vor.u32 1.1754944e-38, %v125
    %v127 = vsel %vm124, %v126, %v122
    %v128 = vmul.f32 1.0, %v127
    %v129 = vld [vmem:[%s2] sm:$0xf]
    %v130 = vld [vmem:[%s4] sm:$0xf]
    %132 = vset.pattern.permute.xlu0 0
    %133 = vperm.xlu0 %132, %v130
    %v134 = vpop.permute.xlu0 %133
    %vm136 = vcmask 97280
    %v138 = vsel %vm136, %v129, 0
    %vm140 = vcmask 1043456
    %v142 = vsel %vm140, %v128, 0
    %144 = vmatpush.msra.mxu0 0.0
    %145 = vmatpush.msra.mxu0 0.0
    %146 = vmatpush.msra.mxu0 0.0
    %147 = vmatpush.msra.mxu0 0.0
    %148 = vmatpush.msra.mxu0 0.0
    %149 = vmatpush.msra.mxu0 0.0
    %150 = vmatpush.msra.mxu0 0.0
    %151 = vmatpush.msra.mxu0 0.0
    %152 = vmatpush.msra.mxu0 0.0
    %153 = vmatpush.msra.mxu0 0.0
    %154 = vmatpush.msra.mxu0 0.0
    %155 = vmatpush.msra.mxu0 0.0
    %156 = vmatpush.msra.mxu0 0.0
    %157 = vmatpush.msra.mxu0 0.0
    %158 = vmatpush.msra.mxu0 %v142
    %159 = vmatpush.msra.mxu0 %v113
    %160 = vmatmul.f32.gmra.mxu0 %v138
    %v161 = vpop.f32.mrf.mxu0
    %v162 = vadd.f32 %v134, %v161
    %163 = vdwg.mxu0
    %v164 = vxor.u32 %v162, 2147483648
    %v165 = vmul.f32 %v164, 1.442695
    %v166 = vpow.pop %v165
    %v167 = vadd.f32 %v166, 1.0
    %v168 = vrcp.pop %v167
    %v169 = vmul.f32 %v167, %v168
    %v170 = vsub.f32 1.0, %v169
    %v171 = vmul.f32 %v168, %v170
    %v172 = vadd.f32 %v168, %v171
    %vm173 = vweird.f32 %v167
    %vm174 = vweird.f32 %v168
    %vm175 = vmor %vm173, %vm174
    %v176 = vsel %vm175, %v168, %v172
    %v177 = vand.u32 2147483647, %v167
    %vm178 = vcmp.eq.f32.partialorder %v177, 8.507059e+37
    %v179 = vand.u32 %v167, 2147483648
    %v180 = vor.u32 1.1754944e-38, %v179
    %v181 = vsel %vm178, %v180, %v176
    %v182 = vmul.f32 1.0, %v181
    %v183 = vld [vmem:[%s5] sm:$0xf]
    %185 = vset.pattern.permute.xlu0 0
    %186 = vperm.xlu0 %185, %v183
    %v187 = vpop.permute.xlu0 %186
    %v189 = vmul.f32 %v182, %v187
    %vm190 = vcmask 60416
    %v191 = vsel %vm190, %v189, 0.0
    %v192 = vrot.slane %v191, 4
    %v193 = vadd.f32 %v191, %v192
    %v194 = vrot.slane %v193, 2
    %v195 = vadd.f32 %v193, %v194
    %v196 = vrot.slane %v195, 1
    %v197 = vadd.f32 %v195, %v196
    %v198 = vld [vmem:[#allocation2] sm:$0x1]
    %200 = vset.pattern.permute.xlu0 0
    %201 = vperm.xlu0 %200, %v198
    %v202 = vpop.permute.xlu0 %201
    %v204 = vperm.slane %v202, 0
    %v205 = vadd.f32 %v197, %v204
    %v206 = vxor.u32 %v205, 2147483648
    %v207 = vmul.f32 %v206, 1.442695
    %v208 = vpow.pop %v207
    %v209 = vadd.f32 %v208, 1.0
    %v210 = vrcp.pop %v209
    %v211 = vmul.f32 %v209, %v210
    %v212 = vsub.f32 1.0, %v211
    %v213 = vmul.f32 %v210, %v212
    %v214 = vadd.f32 %v210, %v213
    %vm215 = vweird.f32 %v209
    %vm216 = vweird.f32 %v210
    %vm217 = vmor %vm215, %vm216
    %v218 = vsel %vm217, %v210, %v214
    %v219 = vand.u32 2147483647, %v209
    %vm220 = vcmp.eq.f32.partialorder %v219, 8.507059e+37
    %v221 = vand.u32 %v209, 2147483648
    %v222 = vor.u32 1.1754944e-38, %v221
    %v223 = vsel %vm220, %v222, %v218
    %v224 = vmul.f32 1.0, %v223
    %vm225 = vcmask 57344
    %226 = vst.msk [vmem:[#allocation6] sm:$0x1] %vm225, %v224
    // Predicated region
    $region34: #{tpu_custom_call.1} parent=1 // pred_check
      _
    $region35: #{tpu_custom_call.1} parent=1 // pred_check_branch
      %228 = sbr.rel (0) target = $region37
    $region36: #{tpu_custom_call.1} parent=1 // pred_region
      %230 = vsyncadd [#allocation5], 0
      %s232 = sshll.u32 [#allocation6], 4
      %s233 = int_to_ptr.vmem [resolvable:$true] %s232
      %s234 = sshll.u32 %s7, 4
      %s235 = int_to_ptr.hbm [resolvable:$true] %s234
      %237 = dma.vmem_to_hbm [thread:$0]  %s233, 16, %s235, [#allocation5]
    $region37: #{tpu_custom_call.1} parent=1 // pred_fallthru
      _
    // Predicated region
    $region38: #{tpu_custom_call.1} parent=1 // pred_check
      _
    $region39: #{tpu_custom_call.1} parent=1 // pred_check_branch
      %239 = sbr.rel (0) target = $region41
    $region40: #{tpu_custom_call.1} parent=1 // pred_region
      %241 = dma.done [#allocation5], 16
    $region41: #{tpu_custom_call.1} parent=1 // pred_fallthru
      _
    %242 = vsyncpa [#allocation4], 1
    %243 = vsyncpa [#allocation5], 1

</llo_original>
